<compile_context>
chip_gen: v6e
topology: v6e:2x2x1
jax: 0.10.0
libtpu: 0.0.40
codegen_flags: <defaults>
</compile_context>

<pallas_src>
import jax
import jax.numpy as jnp
from jax.experimental import pallas as pl
from jax.experimental.pallas import tpu as pltpu


def _round_up(n, m):
    return ((n + m - 1) // m) * m


def decoder_kernel(x_ref, w1_ref, b1_ref, w2_ref, b2_ref, wh_ref, bh_ref,
                   out_ref):
    # f32 input tile; cast to bf16 in-kernel (VPU) instead of a wrapper pass.
    x = x_ref[...].astype(jnp.bfloat16)                           # [TB, D]

    # Layer 1: Linear(D -> H) + ReLU   (Dropout == identity in eval)
    h1 = jnp.dot(x, w1_ref[...], preferred_element_type=jnp.float32)
    h1 = jnp.maximum(h1 + b1_ref[...], 0.0)                       # f32 [TB, H]

    # Layer 2: Linear(H -> H) + ReLU
    h2 = jnp.dot(h1.astype(jnp.bfloat16), w2_ref[...],
                 preferred_element_type=jnp.float32)
    h2 = jnp.maximum(h2 + b2_ref[...], 0.0)                       # f32 [TB, H]

    # Fused heads: columns = [feat | label | zero-pad] -> one lane-dense store.
    out = jnp.dot(h2.astype(jnp.bfloat16), wh_ref[...],
                  preferred_element_type=jnp.float32) + bh_ref[...]
    out_ref[...] = out.astype(out_ref.dtype)                      # bf16 [TB, N]


def decoder_forward(x, params, *, batch_tile=4096, out_dtype=jnp.bfloat16):
    B, D = x.shape
    H = params["w1"].shape[1]
    N = params["wh"].shape[1]            # fused head width, multiple of 128
    assert N % 128 == 0 and N >= D + 1

    # Batch tile: multiple of 128 rows (full MXU M-passes), never below 128,
    # capped at batch_tile (sweep 2048-8192 for production batches).
    TB = max(128, min(batch_tile, _round_up(B, 128)))
    grid = (pl.cdiv(B, TB),)             # partial last tile is edge-masked

    const = pl.Buffered(1)               # grid-invariant -> single buffer
    in_specs = [
        pl.BlockSpec((TB, D), lambda i: (i, 0)),                       # x tile
        pl.BlockSpec((D, H), lambda i: (0, 0), pipeline_mode=const),   # w1
        pl.BlockSpec((1, H), lambda i: (0, 0), pipeline_mode=const),   # b1
        pl.BlockSpec((H, H), lambda i: (0, 0), pipeline_mode=const),   # w2
        pl.BlockSpec((1, H), lambda i: (0, 0), pipeline_mode=const),   # b2
        pl.BlockSpec((H, N), lambda i: (0, 0), pipeline_mode=const),   # wh
        pl.BlockSpec((1, N), lambda i: (0, 0), pipeline_mode=const),   # bh
    ]
    out_specs = pl.BlockSpec((TB, N), lambda i: (i, 0))   # lane-dense output
    out_shape = jax.ShapeDtypeStruct((B, N), out_dtype)

    # Explicit VMEM budget (matters for large TB / input_dim on v7x's 32 MiB
    # scoped / 64 MiB physical VMEM): weights (single-buffered) + double-
    # buffered x/out streams + f32 h1/h2 intermediates, with 2x headroom.
    out_itemsize = jnp.dtype(out_dtype).itemsize
    weight_bytes = sum(int(v.size) * v.dtype.itemsize for v in params.values())
    per_step_bytes = (2 * TB * D * x.dtype.itemsize      # x, double-buffered
                      + 2 * TB * N * out_itemsize        # out, double-buffered
                      + 2 * TB * H * 4)                  # h1/h2 f32
    vmem_limit = int(min(max(2 * (weight_bytes + per_step_bytes), 16 << 20),
                         48 << 20))

    flops = 2 * B * (D * H + H * H + H * N)
    bytes_accessed = (int(x.size) * x.dtype.itemsize + weight_bytes
                      + B * N * out_itemsize)

    out = pl.pallas_call(
        decoder_kernel,
        out_shape=out_shape,
        grid_spec=pltpu.PrefetchScalarGridSpec(
            num_scalar_prefetch=0,
            grid=grid,
            in_specs=in_specs,
            out_specs=out_specs,
        ),
        compiler_params=pltpu.CompilerParams(
            dimension_semantics=("parallel",),
            vmem_limit_bytes=vmem_limit),
        cost_estimate=pl.CostEstimate(
            flops=int(flops), transcendentals=0,
            bytes_accessed=int(bytes_accessed)),
    )(x, params["w1"], params["b1"], params["w2"], params["b2"],
      params["wh"], params["bh"])

    # NOTE: for very large B, consumers should index the padded slab directly
    # (feat = out[:, :D], label = out[:, D]) to avoid extra HBM slice passes.
    return out[:, :D], out[:, D]          # feat [B, D], label [B] (squeeze(1))


def init_params(key, input_dim, hidden_dim=128):
    """PyTorch-Linear-style uniform init; weights stored [in, out], f32."""
    ks = jax.random.split(key, 8)

    def lin(kw, kb, fan_in, fan_out):
        bound = 1.0 / jnp.sqrt(jnp.float32(fan_in))
        w = jax.random.uniform(kw, (fan_in, fan_out), jnp.float32, -bound, bound)
        b = jax.random.uniform(kb, (1, fan_out), jnp.float32, -bound, bound)
        return w, b

    w1, b1 = lin(ks[0], ks[1], input_dim, hidden_dim)
    w2, b2 = lin(ks[2], ks[3], hidden_dim, hidden_dim)
    wf, bf = lin(ks[4], ks[5], hidden_dim, input_dim)
    wl, bl = lin(ks[6], ks[7], hidden_dim, 1)
    return dict(w1=w1, b1=b1, w2=w2, b2=b2, wf=wf, bf=bf, wl=wl, bl=bl)


def fuse_params(p):
    """bf16 matmul weights, f32 biases, heads fused + lane-padded to 128k."""
    H, D = p["wf"].shape
    wh = jnp.concatenate([p["wf"], p["wl"]], axis=1)        # [H, D+1]
    bh = jnp.concatenate([p["bf"], p["bl"]], axis=1)        # [1, D+1]
    N = _round_up(D + 1, 128)
    wh = jnp.pad(wh, ((0, 0), (0, N - (D + 1))))
    bh = jnp.pad(bh, ((0, 0), (0, N - (D + 1))))
    return dict(
        w1=p["w1"].astype(jnp.bfloat16), b1=p["b1"],
        w2=p["w2"].astype(jnp.bfloat16), b2=p["b2"],
        wh=wh.astype(jnp.bfloat16), bh=bh,
    )


def reference_forward(x, p):
    """Pure-JAX reference with identical bf16-operand / f32-accumulate math."""
    bf16 = jnp.bfloat16
    h = jnp.maximum(jnp.dot(x.astype(bf16), p["w1"].astype(bf16),
                            preferred_element_type=jnp.float32) + p["b1"], 0.0)
    h = jnp.maximum(jnp.dot(h.astype(bf16), p["w2"].astype(bf16),
                            preferred_element_type=jnp.float32) + p["b2"], 0.0)
    feat = jnp.dot(h.astype(bf16), p["wf"].astype(bf16),
                   preferred_element_type=jnp.float32) + p["bf"]
    label = (jnp.dot(h.astype(bf16), p["wl"].astype(bf16),
                     preferred_element_type=jnp.float32) + p["bl"])[:, 0]
    return feat, label


if __name__ == "__main__":
    key = jax.random.PRNGKey(0)
    kx, kx2, kp = jax.random.split(key, 3)

    B, INPUT_DIM, HIDDEN_DIM = 64, 32, 128
    x = jax.random.normal(kx, (B, INPUT_DIM), dtype=jnp.float32)
    raw_params = init_params(kp, INPUT_DIM, HIDDEN_DIM)
    params = fuse_params(raw_params)

    # Single-tile case (B < TB): exercises edge-masked partial tile.
    feat, label = decoder_forward(x, params)
    feat = jax.block_until_ready(feat)
    label = jax.block_until_ready(label)

    ref_feat, ref_label = reference_forward(x, raw_params)
    assert feat.shape == (B, INPUT_DIM) and label.shape == (B,)
    assert jnp.allclose(feat.astype(jnp.float32), ref_feat, atol=3e-2, rtol=3e-2)
    assert jnp.allclose(label.astype(jnp.float32), ref_label, atol=3e-2, rtol=3e-2)

    # Multi-step grid with a ragged final tile (grid = cdiv(300, 128) = 3).
    B2 = 300
    x2 = jax.random.normal(kx2, (B2, INPUT_DIM), dtype=jnp.float32)
    feat2, label2 = decoder_forward(x2, params, batch_tile=128)
    feat2 = jax.block_until_ready(feat2)
    label2 = jax.block_until_ready(label2)

    ref_feat2, ref_label2 = reference_forward(x2, raw_params)
    assert feat2.shape == (B2, INPUT_DIM) and label2.shape == (B2,)
    assert jnp.allclose(feat2.astype(jnp.float32), ref_feat2, atol=3e-2, rtol=3e-2)
    assert jnp.allclose(label2.astype(jnp.float32), ref_label2, atol=3e-2, rtol=3e-2)

    print("KERNEL_OK")
</pallas_src>

<mosaic_0001>
module attributes {stable_mosaic.version = 11 : i64} {
  func.func @decoder_kernel(%arg0: i32, %arg1: memref<128x32xf32, #tpu.memory_space<vmem>>, %arg2: memref<32x128xbf16, #tpu.memory_space<vmem>>, %arg3: memref<1x128xf32, #tpu.memory_space<vmem>>, %arg4: memref<128x128xbf16, #tpu.memory_space<vmem>>, %arg5: memref<1x128xf32, #tpu.memory_space<vmem>>, %arg6: memref<128x128xbf16, #tpu.memory_space<vmem>>, %arg7: memref<1x128xf32, #tpu.memory_space<vmem>>, %arg8: memref<128x128xbf16, #tpu.memory_space<vmem>>) attributes {dimension_semantics = [#tpu.dimension_semantics<parallel>], iteration_bounds = array<i64: 1>, scalar_prefetch = 0 : i64, scratch_operands = 0 : i64, tpu.core_type = #tpu.core_type<tc>, window_params = [{transform_indices = @transform_0, window_bounds = array<i64: 128, 32>}, {pipeline_mode = #tpu.pipeline_mode<synchronous>, transform_indices = @transform_1, window_bounds = array<i64: 32, 128>}, {pipeline_mode = #tpu.pipeline_mode<synchronous>, transform_indices = @transform_2, window_bounds = array<i64: 1, 128>}, {pipeline_mode = #tpu.pipeline_mode<synchronous>, transform_indices = @transform_3, window_bounds = array<i64: 128, 128>}, {pipeline_mode = #tpu.pipeline_mode<synchronous>, transform_indices = @transform_4, window_bounds = array<i64: 1, 128>}, {pipeline_mode = #tpu.pipeline_mode<synchronous>, transform_indices = @transform_5, window_bounds = array<i64: 128, 128>}, {pipeline_mode = #tpu.pipeline_mode<synchronous>, transform_indices = @transform_6, window_bounds = array<i64: 1, 128>}, {transform_indices = @transform_7, window_bounds = array<i64: 128, 128>}]} {
    %c0 = arith.constant 0 : index
    %c0_0 = arith.constant 0 : index
    %0 = vector.load %arg1[%c0, %c0_0] : memref<128x32xf32, #tpu.memory_space<vmem>>, vector<128x32xf32>
    %1 = arith.truncf %0 : vector<128x32xf32> to vector<128x32xbf16>
    %c0_1 = arith.constant 0 : index
    %c0_2 = arith.constant 0 : index
    %2 = vector.load %arg2[%c0_1, %c0_2] : memref<32x128xbf16, #tpu.memory_space<vmem>>, vector<32x128xbf16>
    %cst = arith.constant dense<0.000000e+00> : vector<128x128xf32>
    %3 = tpu.matmul %1, %2, %cst {dimension_numbers = #tpu.dot_dimension_numbers<[1], [0], [0], [1], [0, 0, 1, 1], [], []>} : vector<128x32xbf16>, vector<32x128xbf16>, vector<128x128xf32> -> vector<128x128xf32>
    %c0_3 = arith.constant 0 : index
    %c0_4 = arith.constant 0 : index
    %4 = vector.load %arg3[%c0_3, %c0_4] : memref<1x128xf32, #tpu.memory_space<vmem>>, vector<1x128xf32>
    %5 = vector.broadcast %4 : vector<1x128xf32> to vector<128x128xf32>
    %6 = arith.addf %3, %5 : vector<128x128xf32>
    %cst_5 = arith.constant 0.000000e+00 : f32
    %7 = vector.broadcast %cst_5 : f32 to vector<128x128xf32>
    %8 = arith.maximumf %6, %7 : vector<128x128xf32>
    %9 = arith.truncf %8 : vector<128x128xf32> to vector<128x128xbf16>
    %c0_6 = arith.constant 0 : index
    %c0_7 = arith.constant 0 : index
    %10 = vector.load %arg4[%c0_6, %c0_7] : memref<128x128xbf16, #tpu.memory_space<vmem>>, vector<128x128xbf16>
    %cst_8 = arith.constant dense<0.000000e+00> : vector<128x128xf32>
    %11 = tpu.matmul %9, %10, %cst_8 {dimension_numbers = #tpu.dot_dimension_numbers<[1], [0], [0], [1], [0, 0, 1, 1], [], []>} : vector<128x128xbf16>, vector<128x128xbf16>, vector<128x128xf32> -> vector<128x128xf32>
    %c0_9 = arith.constant 0 : index
    %c0_10 = arith.constant 0 : index
    %12 = vector.load %arg5[%c0_9, %c0_10] : memref<1x128xf32, #tpu.memory_space<vmem>>, vector<1x128xf32>
    %13 = vector.broadcast %12 : vector<1x128xf32> to vector<128x128xf32>
    %14 = arith.addf %11, %13 : vector<128x128xf32>
    %cst_11 = arith.constant 0.000000e+00 : f32
    %15 = vector.broadcast %cst_11 : f32 to vector<128x128xf32>
    %16 = arith.maximumf %14, %15 : vector<128x128xf32>
    %17 = arith.truncf %16 : vector<128x128xf32> to vector<128x128xbf16>
    %c0_12 = arith.constant 0 : index
    %c0_13 = arith.constant 0 : index
    %18 = vector.load %arg6[%c0_12, %c0_13] : memref<128x128xbf16, #tpu.memory_space<vmem>>, vector<128x128xbf16>
    %cst_14 = arith.constant dense<0.000000e+00> : vector<128x128xf32>
    %19 = tpu.matmul %17, %18, %cst_14 {dimension_numbers = #tpu.dot_dimension_numbers<[1], [0], [0], [1], [0, 0, 1, 1], [], []>} : vector<128x128xbf16>, vector<128x128xbf16>, vector<128x128xf32> -> vector<128x128xf32>
    %c0_15 = arith.constant 0 : index
    %c0_16 = arith.constant 0 : index
    %20 = vector.load %arg7[%c0_15, %c0_16] : memref<1x128xf32, #tpu.memory_space<vmem>>, vector<1x128xf32>
    %21 = vector.broadcast %20 : vector<1x128xf32> to vector<128x128xf32>
    %22 = arith.addf %19, %21 : vector<128x128xf32>
    %23 = arith.truncf %22 : vector<128x128xf32> to vector<128x128xbf16>
    %c0_17 = arith.constant 0 : index
    %c0_18 = arith.constant 0 : index
    %24 = vector.load %arg8[%c0_17, %c0_18] : memref<128x128xbf16, #tpu.memory_space<vmem>>, vector<128x128xbf16>
    tpu.vector_store %arg8[%c0_17, %c0_18], %23 {strides = array<i32>} : memref<128x128xbf16, #tpu.memory_space<vmem>>, vector<128x128xbf16>,
    return
  }
  func.func @transform_0(%arg0: i32) -> (i32, i32) {
    %c0_i32 = arith.constant 0 : i32
    %c0_i32_0 = arith.constant 0 : i32
    return %arg0, %c0_i32 : i32, i32
  }
  func.func @transform_1(%arg0: i32) -> (i32, i32) {
    %c0_i32 = arith.constant 0 : i32
    %c0_i32_0 = arith.constant 0 : i32
    %c0_i32_1 = arith.constant 0 : i32
    return %c0_i32, %c0_i32_0 : i32, i32
  }
  func.func @transform_2(%arg0: i32) -> (i32, i32) {
    %c0_i32 = arith.constant 0 : i32
    %c0_i32_0 = arith.constant 0 : i32
    %c0_i32_1 = arith.constant 0 : i32
    return %c0_i32, %c0_i32_0 : i32, i32
  }
  func.func @transform_3(%arg0: i32) -> (i32, i32) {
    %c0_i32 = arith.constant 0 : i32
    %c0_i32_0 = arith.constant 0 : i32
    %c0_i32_1 = arith.constant 0 : i32
    return %c0_i32, %c0_i32_0 : i32, i32
  }
  func.func @transform_4(%arg0: i32) -> (i32, i32) {
    %c0_i32 = arith.constant 0 : i32
    %c0_i32_0 = arith.constant 0 : i32
    %c0_i32_1 = arith.constant 0 : i32
    return %c0_i32, %c0_i32_0 : i32, i32
  }
  func.func @transform_5(%arg0: i32) -> (i32, i32) {
    %c0_i32 = arith.constant 0 : i32
    %c0_i32_0 = arith.constant 0 : i32
    %c0_i32_1 = arith.constant 0 : i32
    return %c0_i32, %c0_i32_0 : i32, i32
  }
  func.func @transform_6(%arg0: i32) -> (i32, i32) {
    %c0_i32 = arith.constant 0 : i32
    %c0_i32_0 = arith.constant 0 : i32
    %c0_i32_1 = arith.constant 0 : i32
    return %c0_i32, %c0_i32_0 : i32, i32
  }
  func.func @transform_7(%arg0: i32) -> (i32, i32) {
    %c0_i32 = arith.constant 0 : i32
    %c0_i32_0 = arith.constant 0 : i32
    return %arg0, %c0_i32 : i32, i32
  }
}

</mosaic_0001>

<llo_original>
// kernel: tpu_custom_call.1
$region0: #{tpu_custom_call.1}
  #allocation0 [shape = 'u32[]', space=smem, size = 0x4, offset = 0x4, fixed_abs, tag = 'smem constant byte address 0x4 - core index']
  #allocation1 [shape = 'u32[144,128]{1,0:T(1,128)}', space=vmem, size = 0x12000, scoped, tag = 'internal scratch']
  %s0 = inlined_call_operand.vmem [shape: f32[64,32], index: 0, kind: input, shape index: {}]
  %s1 = inlined_call_operand.vmem [shape: bf16[32,128], index: 1, kind: input, shape index: {}]
  %s2 = inlined_call_operand.vmem [shape: f32[1,128], index: 2, kind: input, shape index: {}]
  %s3 = inlined_call_operand.vmem [shape: bf16[128,128], index: 3, kind: input, shape index: {}]
  %s4 = inlined_call_operand.vmem [shape: f32[1,128], index: 4, kind: input, shape index: {}]
  %s5 = inlined_call_operand.hbm [shape: bf16[128,128], index: 5, kind: input, shape index: {}]
  %s6 = inlined_call_operand.vmem [shape: f32[1,128], index: 6, kind: input, shape index: {}]
  %s7 = inlined_call_operand.hbm [shape: bf16[64,128], index: 7, kind: output, shape index: {}]
  %s8 = sld [smem:[#allocation0]]
  $region42: #{tpu_custom_call.1} parent=0
    _
  %s10 = ssub.s32 1, %s8
  %s11 = scalar_select 0, %s10, %s8
  $region1: #{tpu_custom_call.1} parent=0
    #allocation2 [shape = 'u8[32768]{0}', space=vmem, size = 0x8000, scoped, tag = 'input window, operand 5, single buffered']
    #allocation3 [shape = 's32[1]{0}', space=sflag, size = 0x4, scoped, tag = 'scoped memory for tpu_custom_call.1']
    #allocation4 [shape = 's32[1]{0}', space=sflag, size = 0x4, scoped, tag = 'scoped memory for tpu_custom_call.1']
    #allocation5 [shape = 'u8[32768]{0}', space=vmem, size = 0x8000, scoped, tag = 'output window, operand 0, single buffered']
    %12 = vsyncpa [#allocation3], 0
    %13 = vsyncpa [#allocation4], 0
    // Predicated region
    $region2: #{tpu_custom_call.1} parent=1 // pred_check
      _
    $region3: #{tpu_custom_call.1} parent=1 // pred_check_branch
      %15 = sbr.rel (0) target = $region5
    $region4: #{tpu_custom_call.1} parent=1 // pred_region
      _
    $region5: #{tpu_custom_call.1} parent=1 // pred_fallthru
      _
    // Predicated region
    $region6: #{tpu_custom_call.1} parent=1 // pred_check
      _
    $region7: #{tpu_custom_call.1} parent=1 // pred_check_branch
      %17 = sbr.rel (0) target = $region9
    $region8: #{tpu_custom_call.1} parent=1 // pred_region
      _
    $region9: #{tpu_custom_call.1} parent=1 // pred_fallthru
      _
    // Predicated region
    $region10: #{tpu_custom_call.1} parent=1 // pred_check
      _
    $region11: #{tpu_custom_call.1} parent=1 // pred_check_branch
      %19 = sbr.rel (0) target = $region13
    $region12: #{tpu_custom_call.1} parent=1 // pred_region
      _
    $region13: #{tpu_custom_call.1} parent=1 // pred_fallthru
      _
    // Predicated region
    $region14: #{tpu_custom_call.1} parent=1 // pred_check
      _
    $region15: #{tpu_custom_call.1} parent=1 // pred_check_branch
      %21 = sbr.rel (0) target = $region17
    $region16: #{tpu_custom_call.1} parent=1 // pred_region
      _
    $region17: #{tpu_custom_call.1} parent=1 // pred_fallthru
      _
    // Predicated region
    $region18: #{tpu_custom_call.1} parent=1 // pred_check
      _
    $region19: #{tpu_custom_call.1} parent=1 // pred_check_branch
      %23 = sbr.rel (0) target = $region21
    $region20: #{tpu_custom_call.1} parent=1 // pred_region
      _
    $region21: #{tpu_custom_call.1} parent=1 // pred_fallthru
      _
    // Predicated region
    $region22: #{tpu_custom_call.1} parent=1 // pred_check
      _
    $region23: #{tpu_custom_call.1} parent=1 // pred_check_branch
      %25 = sbr.rel (0) target = $region25
    $region24: #{tpu_custom_call.1} parent=1 // pred_region
      %s27 = ssub.s32 1024, 1024
      %28 = vsyncadd [#allocation3], %s27
      %s29 = sshll.u32 [#allocation2], 4
      %s30 = int_to_ptr.vmem [resolvable:$true] %s29
      %35 = dma.hbm_to_vmem [thread:$0]  %s5, 1024, %s30, [#allocation3], 64, 64, 4
    $region25: #{tpu_custom_call.1} parent=1 // pred_fallthru
      _
    // Predicated region
    $region26: #{tpu_custom_call.1} parent=1 // pred_check
      _
    $region27: #{tpu_custom_call.1} parent=1 // pred_check_branch
      %37 = sbr.rel (0) target = $region29
    $region28: #{tpu_custom_call.1} parent=1 // pred_region
      _
    $region29: #{tpu_custom_call.1} parent=1 // pred_fallthru
      _
    // Predicated region
    $region30: #{tpu_custom_call.1} parent=1 // pred_check
      _
    $region31: #{tpu_custom_call.1} parent=1 // pred_check_branch
      %39 = sbr.rel (0) target = $region33
    $region32: #{tpu_custom_call.1} parent=1 // pred_region
      %40 = dma.done [#allocation3], 1024
    $region33: #{tpu_custom_call.1} parent=1 // pred_fallthru
      _
    %v42 = vld [vmem:[%s0] sm:$0xff]
    %v43 = vld [vmem:[%s0 + $0x8] sm:$0xff]
    %v44 = vld [vmem:[%s0 + $0x10] sm:$0xff]
    %v45 = vld [vmem:[%s0 + $0x18] sm:$0xff]
    %v46 = vld [vmem:[%s0 + $0x20] sm:$0xff]
    %v47 = vld [vmem:[%s0 + $0x28] sm:$0xff]
    %v48 = vld [vmem:[%s0 + $0x30] sm:$0xff]
    %v49 = vld [vmem:[%s0 + $0x38] sm:$0xff]
    %v50 = vld [vmem:[%s0 + $0x40] sm:$0xff]
    %v51 = vld [vmem:[%s0 + $0x48] sm:$0xff]
    %v52 = vld [vmem:[%s0 + $0x50] sm:$0xff]
    %v53 = vld [vmem:[%s0 + $0x58] sm:$0xff]
    %v54 = vld [vmem:[%s0 + $0x60] sm:$0xff]
    %v55 = vld [vmem:[%s0 + $0x68] sm:$0xff]
    %v56 = vld [vmem:[%s0 + $0x70] sm:$0xff]
    %v57 = vld [vmem:[%s0 + $0x78] sm:$0xff]
    %v58 = vpack.c.bf16 %v43, %v42
    %v59 = vpack.c.bf16 %v45, %v44
    %v60 = vpack.c.bf16 %v47, %v46
    %v61 = vpack.c.bf16 %v49, %v48
    %v62 = vpack.c.bf16 %v51, %v50
    %v63 = vpack.c.bf16 %v53, %v52
    %v64 = vpack.c.bf16 %v55, %v54
    %v65 = vpack.c.bf16 %v57, %v56
    %v66 = vld [vmem:[%s1] sm:$0xf]
    %v67 = vld [vmem:[%s1 + $0x4] sm:$0xf]
    %v68 = vld [vmem:[%s1 + $0x8] sm:$0xf]
    %v69 = vld [vmem:[%s1 + $0xc] sm:$0xf]
    %v70 = vld [vmem:[%s2] sm:$0x1]
    %v72 = vlaneseq
    %v73 = vshrl.u32 %v72, 7
    %v74 = vsub.s32 0, %v73
    %v75 = vrot.slane %v70, %v74
    %v81 = vunpack.c.l.b16 %v66
    %v82 = vunpack.c.l.b16 %v67
    %v83 = vunpack.c.l.b16 %v68
    %v84 = vunpack.c.l.b16 %v69
    %v85 = vpack.c.b16 %v82, %v81
    %v86 = vpack.c.b16 %v84, %v83
    %vm89 = vcmask 261120
    %v91 = vsel %vm89, %v58, 0
    %v94 = vsel %vm89, %v59, 0
    %v97 = vsel %vm89, %v60, 0
    %v100 = vsel %vm89, %v61, 0
    %v103 = vsel %vm89, %v62, 0
    %v106 = vsel %vm89, %v63, 0
    %v109 = vsel %vm89, %v64, 0
    %v112 = vsel %vm89, %v65, 0
    %114 = vmatprep.subr.bf16.mxu0 0
    %115 = vmatpush1.bf16.msra.mxu0 0
    %116 = vmatprep.subr.bf16.mxu0 0
    %117 = vmatpush1.bf16.msra.mxu0 0
    %118 = vmatprep.subr.bf16.mxu0 0
    %119 = vmatpush1.bf16.msra.mxu0 0
    %120 = vmatprep.subr.bf16.mxu0 0
    %121 = vmatpush1.bf16.msra.mxu0 0
    %122 = vmatprep.subr.bf16.mxu0 0
    %123 = vmatpush1.bf16.msra.mxu0 0
    %124 = vmatprep.subr.bf16.mxu0 0
    %125 = vmatpush1.bf16.msra.mxu0 0
    %126 = vmatprep.subr.bf16.mxu0 0
    %127 = vmatpush1.bf16.msra.mxu0 %v86
    %128 = vmatprep.subr.bf16.mxu0 0
    %129 = vmatpush1.bf16.msra.mxu0 %v85
    %130 = vmatprep.subr.bf16.mxu0 0
    %131 = vmatpush2.bf16.msra.mxu0 0
    %132 = vmatprep.subr.bf16.mxu0 0
    %133 = vmatpush2.bf16.msra.mxu0 0
    %134 = vmatprep.subr.bf16.mxu0 0
    %135 = vmatpush2.bf16.msra.mxu0 0
    %136 = vmatprep.subr.bf16.mxu0 0
    %137 = vmatpush2.bf16.msra.mxu0 0
    %138 = vmatprep.subr.bf16.mxu0 0
    %139 = vmatpush2.bf16.msra.mxu0 0
    %140 = vmatprep.subr.bf16.mxu0 0
    %141 = vmatpush2.bf16.msra.mxu0 0
    %142 = vmatprep.subr.bf16.mxu0 0
    %143 = vmatpush2.bf16.msra.mxu0 0
    %144 = vmatprep.subr.bf16.mxu0 0
    %145 = vmatpush2.bf16.msra.mxu0 0
    %146 = vmatprep.mubr.bf16.mxu0 0
    %147 = vmatmul.mubr.bf16.gmra.mxu0 %v91
    %v148 = vpop.f32.mrf.mxu0
    %v149 = vadd.f32 %v75, %v148
    %v150 = vpop.f32.mrf.mxu0
    %v151 = vpop.f32.mrf.mxu0
    %v152 = vadd.f32 %v75, %v151
    %v153 = vpop.f32.mrf.mxu0
    %154 = vmatprep.mubr.bf16.mxu0 0
    %155 = vmatmul.mubr.bf16.gmra.mxu0 %v94
    %v156 = vpop.f32.mrf.mxu0
    %v157 = vadd.f32 %v75, %v156
    %v158 = vpop.f32.mrf.mxu0
    %v159 = vpop.f32.mrf.mxu0
    %v160 = vadd.f32 %v75, %v159
    %v161 = vpop.f32.mrf.mxu0
    %162 = vmatprep.mubr.bf16.mxu0 0
    %163 = vmatmul.mubr.bf16.gmra.mxu0 %v97
    %v164 = vpop.f32.mrf.mxu0
    %v165 = vadd.f32 %v75, %v164
    %v166 = vpop.f32.mrf.mxu0
    %v167 = vpop.f32.mrf.mxu0
    %v168 = vadd.f32 %v75, %v167
    %v169 = vpop.f32.mrf.mxu0
    %170 = vmatprep.mubr.bf16.mxu0 0
    %171 = vmatmul.mubr.bf16.gmra.mxu0 %v100
    %v172 = vpop.f32.mrf.mxu0
    %v173 = vadd.f32 %v75, %v172
    %v174 = vpop.f32.mrf.mxu0
    %v175 = vpop.f32.mrf.mxu0
    %v176 = vadd.f32 %v75, %v175
    %v177 = vpop.f32.mrf.mxu0
    %178 = vmatprep.mubr.bf16.mxu0 0
    %179 = vmatmul.mubr.bf16.gmra.mxu0 %v103
    %v180 = vpop.f32.mrf.mxu0
    %v181 = vadd.f32 %v75, %v180
    %v182 = vpop.f32.mrf.mxu0
    %v183 = vpop.f32.mrf.mxu0
    %v184 = vadd.f32 %v75, %v183
    %v185 = vpop.f32.mrf.mxu0
    %186 = vmatprep.mubr.bf16.mxu0 0
    %187 = vmatmul.mubr.bf16.gmra.mxu0 %v106
    %v188 = vpop.f32.mrf.mxu0
    %v189 = vadd.f32 %v75, %v188
    %v190 = vpop.f32.mrf.mxu0
    %v191 = vpop.f32.mrf.mxu0
    %v192 = vadd.f32 %v75, %v191
    %v193 = vpop.f32.mrf.mxu0
    %194 = vmatprep.mubr.bf16.mxu0 0
    %195 = vmatmul.mubr.bf16.gmra.mxu0 %v109
    %v196 = vpop.f32.mrf.mxu0
    %v197 = vadd.f32 %v75, %v196
    %v198 = vpop.f32.mrf.mxu0
    %v199 = vpop.f32.mrf.mxu0
    %v200 = vadd.f32 %v75, %v199
    %v201 = vpop.f32.mrf.mxu0
    %202 = vmatprep.mubr.bf16.mxu0 0
    %203 = vmatmul.mubr.bf16.gmra.mxu0 %v112
    %v204 = vpop.f32.mrf.mxu0
    %v205 = vadd.f32 %v75, %v204
    %v206 = vpop.f32.mrf.mxu0
    %v207 = vpop.f32.mrf.mxu0
    %v208 = vadd.f32 %v75, %v207
    %v209 = vpop.f32.mrf.mxu0
    %210 = vdwg.mxu0
    %v211 = vmax.f32 %v149, 0.0
    %v212 = vmax.f32 %v152, 0.0
    %v213 = vmax.f32 %v157, 0.0
    %v214 = vmax.f32 %v160, 0.0
    %v215 = vmax.f32 %v165, 0.0
    %v216 = vmax.f32 %v168, 0.0
    %v217 = vmax.f32 %v173, 0.0
    %v218 = vmax.f32 %v176, 0.0
    %v219 = vmax.f32 %v181, 0.0
    %v220 = vmax.f32 %v184, 0.0
    %v221 = vmax.f32 %v189, 0.0
    %v222 = vmax.f32 %v192, 0.0
    %v223 = vmax.f32 %v197, 0.0
    %v224 = vmax.f32 %v200, 0.0
    %v225 = vmax.f32 %v205, 0.0
    %v226 = vmax.f32 %v208, 0.0
    %v227 = vpack.c.bf16 %v212, %v211
    %v228 = vpack.c.bf16 %v214, %v213
    %v229 = vpack.c.bf16 %v216, %v215
    %v230 = vpack.c.bf16 %v218, %v217
    %v231 = vpack.c.bf16 %v220, %v219
    %v232 = vpack.c.bf16 %v222, %v221
    %v233 = vpack.c.bf16 %v224, %v223
    %v234 = vpack.c.bf16 %v226, %v225
    %v235 = vld [vmem:[%s3] sm:$0xf]
    %v236 = vld [vmem:[%s3 + $0x4] sm:$0xf]
    %v237 = vld [vmem:[%s3 + $0x8] sm:$0xf]
    %v238 = vld [vmem:[%s3 + $0xc] sm:$0xf]
    %v239 = vld [vmem:[%s3 + $0x10] sm:$0xf]
    %v240 = vld [vmem:[%s3 + $0x14] sm:$0xf]
    %v241 = vld [vmem:[%s3 + $0x18] sm:$0xf]
    %v242 = vld [vmem:[%s3 + $0x1c] sm:$0xf]
    %v243 = vld [vmem:[%s3 + $0x20] sm:$0xf]
    %v244 = vld [vmem:[%s3 + $0x24] sm:$0xf]
    %v245 = vld [vmem:[%s3 + $0x28] sm:$0xf]
    %v246 = vld [vmem:[%s3 + $0x2c] sm:$0xf]
    %v247 = vld [vmem:[%s3 + $0x30] sm:$0xf]
    %v248 = vld [vmem:[%s3 + $0x34] sm:$0xf]
    %v249 = vld [vmem:[%s3 + $0x38] sm:$0xf]
    %v250 = vld [vmem:[%s3 + $0x3c] sm:$0xf]
    %v251 = vld [vmem:[%s4] sm:$0x1]
    %v253 = vlaneseq
    %v254 = vshrl.u32 %v253, 7
    %v255 = vsub.s32 0, %v254
    %v256 = vrot.slane %v251, %v255
    %v274 = vunpack.c.l.b16 %v235
    %v275 = vunpack.c.l.b16 %v236
    %v276 = vunpack.c.l.b16 %v237
    %v277 = vunpack.c.l.b16 %v238
    %v278 = vunpack.c.l.b16 %v239
    %v279 = vunpack.c.l.b16 %v240
    %v280 = vunpack.c.l.b16 %v241
    %v281 = vunpack.c.l.b16 %v242
    %v282 = vunpack.c.l.b16 %v243
    %v283 = vunpack.c.l.b16 %v244
    %v284 = vunpack.c.l.b16 %v245
    %v285 = vunpack.c.l.b16 %v246
    %v286 = vunpack.c.l.b16 %v247
    %v287 = vunpack.c.l.b16 %v248
    %v288 = vunpack.c.l.b16 %v249
    %v289 = vunpack.c.l.b16 %v250
    %v290 = vpack.c.b16 %v275, %v274
    %v291 = vpack.c.b16 %v277, %v276
    %v292 = vpack.c.b16 %v279, %v278
    %v293 = vpack.c.b16 %v281, %v280
    %v294 = vpack.c.b16 %v283, %v282
    %v295 = vpack.c.b16 %v285, %v284
    %v296 = vpack.c.b16 %v287, %v286
    %v297 = vpack.c.b16 %v289, %v288
    %306 = vmatprep.subr.bf16.mxu0 0
    %307 = vmatpush1.bf16.msra.mxu0 %v297
    %308 = vmatprep.subr.bf16.mxu0 0
    %309 = vmatpush1.bf16.msra.mxu0 %v296
    %310 = vmatprep.subr.bf16.mxu0 0
    %311 = vmatpush1.bf16.msra.mxu0 %v295
    %312 = vmatprep.subr.bf16.mxu0 0
    %313 = vmatpush1.bf16.msra.mxu0 %v294
    %314 = vmatprep.subr.bf16.mxu0 0
    %315 = vmatpush1.bf16.msra.mxu0 %v293
    %316 = vmatprep.subr.bf16.mxu0 0
    %317 = vmatpush1.bf16.msra.mxu0 %v292
    %318 = vmatprep.subr.bf16.mxu0 0
    %319 = vmatpush1.bf16.msra.mxu0 %v291
    %320 = vmatprep.subr.bf16.mxu0 0
    %321 = vmatpush1.bf16.msra.mxu0 %v290
    %322 = vmatprep.subr.bf16.mxu0 0
    %323 = vmatpush2.bf16.msra.mxu0 0
    %324 = vmatprep.subr.bf16.mxu0 0
    %325 = vmatpush2.bf16.msra.mxu0 0
    %326 = vmatprep.subr.bf16.mxu0 0
    %327 = vmatpush2.bf16.msra.mxu0 0
    %328 = vmatprep.subr.bf16.mxu0 0
    %329 = vmatpush2.bf16.msra.mxu0 0
    %330 = vmatprep.subr.bf16.mxu0 0
    %331 = vmatpush2.bf16.msra.mxu0 0
    %332 = vmatprep.subr.bf16.mxu0 0
    %333 = vmatpush2.bf16.msra.mxu0 0
    %334 = vmatprep.subr.bf16.mxu0 0
    %335 = vmatpush2.bf16.msra.mxu0 0
    %336 = vmatprep.subr.bf16.mxu0 0
    %337 = vmatpush2.bf16.msra.mxu0 0
    %338 = vmatprep.mubr.bf16.mxu0 0
    %339 = vmatmul.mubr.bf16.gmra.mxu0 %v227
    %v340 = vpop.f32.mrf.mxu0
    %v341 = vadd.f32 %v256, %v340
    %v342 = vpop.f32.mrf.mxu0
    %v343 = vpop.f32.mrf.mxu0
    %v344 = vadd.f32 %v256, %v343
    %v345 = vpop.f32.mrf.mxu0
    %346 = vmatprep.mubr.bf16.mxu0 0
    %347 = vmatmul.mubr.bf16.gmra.mxu0 %v228
    %v348 = vpop.f32.mrf.mxu0
    %v349 = vadd.f32 %v256, %v348
    %v350 = vpop.f32.mrf.mxu0
    %v351 = vpop.f32.mrf.mxu0
    %v352 = vadd.f32 %v256, %v351
    %v353 = vpop.f32.mrf.mxu0
    %354 = vmatprep.mubr.bf16.mxu0 0
    %355 = vmatmul.mubr.bf16.gmra.mxu0 %v229
    %v356 = vpop.f32.mrf.mxu0
    %v357 = vadd.f32 %v256, %v356
    %v358 = vpop.f32.mrf.mxu0
    %v359 = vpop.f32.mrf.mxu0
    %v360 = vadd.f32 %v256, %v359
    %v361 = vpop.f32.mrf.mxu0
    %362 = vmatprep.mubr.bf16.mxu0 0
    %363 = vmatmul.mubr.bf16.gmra.mxu0 %v230
    %v364 = vpop.f32.mrf.mxu0
    %v365 = vadd.f32 %v256, %v364
    %v366 = vpop.f32.mrf.mxu0
    %v367 = vpop.f32.mrf.mxu0
    %v368 = vadd.f32 %v256, %v367
    %v369 = vpop.f32.mrf.mxu0
    %370 = vmatprep.mubr.bf16.mxu0 0
    %371 = vmatmul.mubr.bf16.gmra.mxu0 %v231
    %v372 = vpop.f32.mrf.mxu0
    %v373 = vadd.f32 %v256, %v372
    %v374 = vpop.f32.mrf.mxu0
    %v375 = vpop.f32.mrf.mxu0
    %v376 = vadd.f32 %v256, %v375
    %v377 = vpop.f32.mrf.mxu0
    %378 = vmatprep.mubr.bf16.mxu0 0
    %379 = vmatmul.mubr.bf16.gmra.mxu0 %v232
    %v380 = vpop.f32.mrf.mxu0
    %v381 = vadd.f32 %v256, %v380
    %v382 = vpop.f32.mrf.mxu0
    %v383 = vpop.f32.mrf.mxu0
    %v384 = vadd.f32 %v256, %v383
    %v385 = vpop.f32.mrf.mxu0
    %386 = vmatprep.mubr.bf16.mxu0 0
    %387 = vmatmul.mubr.bf16.gmra.mxu0 %v233
    %v388 = vpop.f32.mrf.mxu0
    %v389 = vadd.f32 %v256, %v388
    %v390 = vpop.f32.mrf.mxu0
    %v391 = vpop.f32.mrf.mxu0
    %v392 = vadd.f32 %v256, %v391
    %v393 = vpop.f32.mrf.mxu0
    %394 = vmatprep.mubr.bf16.mxu0 0
    %395 = vmatmul.mubr.bf16.gmra.mxu0 %v234
    %v396 = vpop.f32.mrf.mxu0
    %v397 = vadd.f32 %v256, %v396
    %v398 = vpop.f32.mrf.mxu0
    %v399 = vpop.f32.mrf.mxu0
    %v400 = vadd.f32 %v256, %v399
    %v401 = vpop.f32.mrf.mxu0
    %402 = vdwg.mxu0
    %v403 = vmax.f32 %v341, 0.0
    %v404 = vmax.f32 %v344, 0.0
    %v405 = vmax.f32 %v349, 0.0
    %v406 = vmax.f32 %v352, 0.0
    %v407 = vmax.f32 %v357, 0.0
    %v408 = vmax.f32 %v360, 0.0
    %v409 = vmax.f32 %v365, 0.0
    %v410 = vmax.f32 %v368, 0.0
    %v411 = vmax.f32 %v373, 0.0
    %v412 = vmax.f32 %v376, 0.0
    %v413 = vmax.f32 %v381, 0.0
    %v414 = vmax.f32 %v384, 0.0
    %v415 = vmax.f32 %v389, 0.0
    %v416 = vmax.f32 %v392, 0.0
    %v417 = vmax.f32 %v397, 0.0
    %v418 = vmax.f32 %v400, 0.0
    %v419 = vpack.c.bf16 %v404, %v403
    %v420 = vpack.c.bf16 %v406, %v405
    %v421 = vpack.c.bf16 %v408, %v407
    %v422 = vpack.c.bf16 %v410, %v409
    %v423 = vpack.c.bf16 %v412, %v411
    %v424 = vpack.c.bf16 %v414, %v413
    %v425 = vpack.c.bf16 %v416, %v415
    %v426 = vpack.c.bf16 %v418, %v417
    %v427 = vld [vmem:[#allocation2] sm:$0xf]
    %v428 = vld [vmem:[#allocation2 + $0x4] sm:$0xf]
    %v429 = vld [vmem:[#allocation2 + $0x8] sm:$0xf]
    %v430 = vld [vmem:[#allocation2 + $0xc] sm:$0xf]
    %v431 = vld [vmem:[#allocation2 + $0x10] sm:$0xf]
    %v432 = vld [vmem:[#allocation2 + $0x14] sm:$0xf]
    %v433 = vld [vmem:[#allocation2 + $0x18] sm:$0xf]
    %v434 = vld [vmem:[#allocation2 + $0x1c] sm:$0xf]
    %v435 = vld [vmem:[#allocation2 + $0x20] sm:$0xf]
    %v436 = vld [vmem:[#allocation2 + $0x24] sm:$0xf]
    %v437 = vld [vmem:[#allocation2 + $0x28] sm:$0xf]
    %v438 = vld [vmem:[#allocation2 + $0x2c] sm:$0xf]
    %v439 = vld [vmem:[#allocation2 + $0x30] sm:$0xf]
    %v440 = vld [vmem:[#allocation2 + $0x34] sm:$0xf]
    %v441 = vld [vmem:[#allocation2 + $0x38] sm:$0xf]
    %v442 = vld [vmem:[#allocation2 + $0x3c] sm:$0xf]
    %v443 = vld [vmem:[%s6] sm:$0x1]
    %v445 = vlaneseq
    %v446 = vshrl.u32 %v445, 7
    %v447 = vsub.s32 0, %v446
    %v448 = vrot.slane %v443, %v447
    %v466 = vunpack.c.l.b16 %v427
    %v467 = vunpack.c.l.b16 %v428
    %v468 = vunpack.c.l.b16 %v429
    %v469 = vunpack.c.l.b16 %v430
    %v470 = vunpack.c.l.b16 %v431
    %v471 = vunpack.c.l.b16 %v432
    %v472 = vunpack.c.l.b16 %v433
    %v473 = vunpack.c.l.b16 %v434
    %v474 = vunpack.c.l.b16 %v435
    %v475 = vunpack.c.l.b16 %v436
    %v476 = vunpack.c.l.b16 %v437
    %v477 = vunpack.c.l.b16 %v438
    %v478 = vunpack.c.l.b16 %v439
    %v479 = vunpack.c.l.b16 %v440
    %v480 = vunpack.c.l.b16 %v441
    %v481 = vunpack.c.l.b16 %v442
    %v482 = vpack.c.b16 %v467, %v466
    %v483 = vpack.c.b16 %v469, %v468
    %v484 = vpack.c.b16 %v471, %v470
    %v485 = vpack.c.b16 %v473, %v472
    %v486 = vpack.c.b16 %v475, %v474
    %v487 = vpack.c.b16 %v477, %v476
    %v488 = vpack.c.b16 %v479, %v478
    %v489 = vpack.c.b16 %v481, %v480
    %498 = vmatprep.subr.bf16.mxu0 0
    %499 = vmatpush1.bf16.msra.mxu0 %v489
    %500 = vmatprep.subr.bf16.mxu0 0
    %501 = vmatpush1.bf16.msra.mxu0 %v488
    %502 = vmatprep.subr.bf16.mxu0 0
    %503 = vmatpush1.bf16.msra.mxu0 %v487
    %504 = vmatprep.subr.bf16.mxu0 0
    %505 = vmatpush1.bf16.msra.mxu0 %v486
    %506 = vmatprep.subr.bf16.mxu0 0
    %507 = vmatpush1.bf16.msra.mxu0 %v485
    %508 = vmatprep.subr.bf16.mxu0 0
    %509 = vmatpush1.bf16.msra.mxu0 %v484
    %510 = vmatprep.subr.bf16.mxu0 0
    %511 = vmatpush1.bf16.msra.mxu0 %v483
    %512 = vmatprep.subr.bf16.mxu0 0
    %513 = vmatpush1.bf16.msra.mxu0 %v482
    %514 = vmatprep.subr.bf16.mxu0 0
    %515 = vmatpush2.bf16.msra.mxu0 0
    %516 = vmatprep.subr.bf16.mxu0 0
    %517 = vmatpush2.bf16.msra.mxu0 0
    %518 = vmatprep.subr.bf16.mxu0 0
    %519 = vmatpush2.bf16.msra.mxu0 0
    %520 = vmatprep.subr.bf16.mxu0 0
    %521 = vmatpush2.bf16.msra.mxu0 0
    %522 = vmatprep.subr.bf16.mxu0 0
    %523 = vmatpush2.bf16.msra.mxu0 0
    %524 = vmatprep.subr.bf16.mxu0 0
    %525 = vmatpush2.bf16.msra.mxu0 0
    %526 = vmatprep.subr.bf16.mxu0 0
    %527 = vmatpush2.bf16.msra.mxu0 0
    %528 = vmatprep.subr.bf16.mxu0 0
    %529 = vmatpush2.bf16.msra.mxu0 0
    %530 = vmatprep.mubr.bf16.mxu0 0
    %531 = vmatmul.mubr.bf16.gmra.mxu0 %v419
    %v532 = vpop.f32.mrf.mxu0
    %v533 = vadd.f32 %v448, %v532
    %v534 = vpop.f32.mrf.mxu0
    %v535 = vpop.f32.mrf.mxu0
    %v536 = vadd.f32 %v448, %v535
    %v537 = vpop.f32.mrf.mxu0
    %538 = vmatprep.mubr.bf16.mxu0 0
    %539 = vmatmul.mubr.bf16.gmra.mxu0 %v420
    %v540 = vpop.f32.mrf.mxu0
    %v541 = vadd.f32 %v448, %v540
    %v542 = vpop.f32.mrf.mxu0
    %v543 = vpop.f32.mrf.mxu0
    %v544 = vadd.f32 %v448, %v543
    %v545 = vpop.f32.mrf.mxu0
    %546 = vmatprep.mubr.bf16.mxu0 0
    %547 = vmatmul.mubr.bf16.gmra.mxu0 %v421
    %v548 = vpop.f32.mrf.mxu0
    %v549 = vadd.f32 %v448, %v548
    %v550 = vpop.f32.mrf.mxu0
    %v551 = vpop.f32.mrf.mxu0
    %v552 = vadd.f32 %v448, %v551
    %v553 = vpop.f32.mrf.mxu0
    %554 = vmatprep.mubr.bf16.mxu0 0
    %555 = vmatmul.mubr.bf16.gmra.mxu0 %v422
    %v556 = vpop.f32.mrf.mxu0
    %v557 = vadd.f32 %v448, %v556
    %v558 = vpop.f32.mrf.mxu0
    %v559 = vpop.f32.mrf.mxu0
    %v560 = vadd.f32 %v448, %v559
    %v561 = vpop.f32.mrf.mxu0
    %562 = vmatprep.mubr.bf16.mxu0 0
    %563 = vmatmul.mubr.bf16.gmra.mxu0 %v423
    %v564 = vpop.f32.mrf.mxu0
    %v565 = vadd.f32 %v448, %v564
    %v566 = vpop.f32.mrf.mxu0
    %v567 = vpop.f32.mrf.mxu0
    %v568 = vadd.f32 %v448, %v567
    %v569 = vpop.f32.mrf.mxu0
    %570 = vmatprep.mubr.bf16.mxu0 0
    %571 = vmatmul.mubr.bf16.gmra.mxu0 %v424
    %v572 = vpop.f32.mrf.mxu0
    %v573 = vadd.f32 %v448, %v572
    %v574 = vpop.f32.mrf.mxu0
    %v575 = vpop.f32.mrf.mxu0
    %v576 = vadd.f32 %v448, %v575
    %v577 = vpop.f32.mrf.mxu0
    %578 = vmatprep.mubr.bf16.mxu0 0
    %579 = vmatmul.mubr.bf16.gmra.mxu0 %v425
    %v580 = vpop.f32.mrf.mxu0
    %v581 = vadd.f32 %v448, %v580
    %v582 = vpop.f32.mrf.mxu0
    %v583 = vpop.f32.mrf.mxu0
    %v584 = vadd.f32 %v448, %v583
    %v585 = vpop.f32.mrf.mxu0
    %586 = vmatprep.mubr.bf16.mxu0 0
    %587 = vmatmul.mubr.bf16.gmra.mxu0 %v426
    %v588 = vpop.f32.mrf.mxu0
    %v589 = vadd.f32 %v448, %v588
    %v590 = vpop.f32.mrf.mxu0
    %v591 = vpop.f32.mrf.mxu0
    %v592 = vadd.f32 %v448, %v591
    %v593 = vpop.f32.mrf.mxu0
    %594 = vdwg.mxu0
    %v595 = vpack.c.bf16 %v536, %v533
    %v596 = vpack.c.bf16 %v544, %v541
    %v597 = vpack.c.bf16 %v552, %v549
    %v598 = vpack.c.bf16 %v560, %v557
    %v599 = vpack.c.bf16 %v568, %v565
    %v600 = vpack.c.bf16 %v576, %v573
    %v601 = vpack.c.bf16 %v584, %v581
    %v602 = vpack.c.bf16 %v592, %v589
    %v611 = vunpack.c.l.b16 %v595
    %v612 = vunpack.c.h.b16 %v595
    %v613 = vunpack.c.l.b16 %v596
    %v614 = vunpack.c.h.b16 %v596
    %v615 = vunpack.c.l.b16 %v597
    %v616 = vunpack.c.h.b16 %v597
    %v617 = vunpack.c.l.b16 %v598
    %v618 = vunpack.c.h.b16 %v598
    %v619 = vunpack.c.l.b16 %v599
    %v620 = vunpack.c.h.b16 %v599
    %v621 = vunpack.c.l.b16 %v600
    %v622 = vunpack.c.h.b16 %v600
    %v623 = vunpack.c.l.b16 %v601
    %v624 = vunpack.c.h.b16 %v601
    %v625 = vunpack.c.l.b16 %v602
    %v626 = vunpack.c.h.b16 %v602
    %v627 = vpack.c.b16 %v611, %v611
    %v628 = vpack.c.b16 %v612, %v612
    %v629 = vpack.c.b16 %v613, %v613
    %v630 = vpack.c.b16 %v614, %v614
    %v631 = vpack.c.b16 %v615, %v615
    %v632 = vpack.c.b16 %v616, %v616
    %v633 = vpack.c.b16 %v617, %v617
    %v634 = vpack.c.b16 %v618, %v618
    %v635 = vpack.c.b16 %v619, %v619
    %v636 = vpack.c.b16 %v620, %v620
    %v637 = vpack.c.b16 %v621, %v621
    %v638 = vpack.c.b16 %v622, %v622
    %v639 = vpack.c.b16 %v623, %v623
    %v640 = vpack.c.b16 %v624, %v624
    %v641 = vpack.c.b16 %v625, %v625
    %v642 = vpack.c.b16 %v626, %v626
    %659 = vst [vmem:[#allocation5] sm:$0xf] %v627
    %660 = vst [vmem:[#allocation5 + $0x4] sm:$0xf] %v628
    %661 = vst [vmem:[#allocation5 + $0x8] sm:$0xf] %v629
    %662 = vst [vmem:[#allocation5 + $0xc] sm:$0xf] %v630
    %663 = vst [vmem:[#allocation5 + $0x10] sm:$0xf] %v631
    %664 = vst [vmem:[#allocation5 + $0x14] sm:$0xf] %v632
    %665 = vst [vmem:[#allocation5 + $0x18] sm:$0xf] %v633
    %666 = vst [vmem:[#allocation5 + $0x1c] sm:$0xf] %v634
    %667 = vst [vmem:[#allocation5 + $0x20] sm:$0xf] %v635
    %668 = vst [vmem:[#allocation5 + $0x24] sm:$0xf] %v636
    %669 = vst [vmem:[#allocation5 + $0x28] sm:$0xf] %v637
    %670 = vst [vmem:[#allocation5 + $0x2c] sm:$0xf] %v638
    %671 = vst [vmem:[#allocation5 + $0x30] sm:$0xf] %v639
    %672 = vst [vmem:[#allocation5 + $0x34] sm:$0xf] %v640
    %673 = vst [vmem:[#allocation5 + $0x38] sm:$0xf] %v641
    %674 = vst [vmem:[#allocation5 + $0x3c] sm:$0xf] %v642
    // Predicated region
    $region34: #{tpu_custom_call.1} parent=1 // pred_check
      _
    $region35: #{tpu_custom_call.1} parent=1 // pred_check_branch
      %676 = sbr.rel (0) target = $region37
    $region36: #{tpu_custom_call.1} parent=1 // pred_region
      %s678 = ssub.s32 1024, 512
      %679 = vsyncadd [#allocation4], %s678
      %s680 = sshll.u32 [#allocation5], 4
      %s681 = int_to_ptr.vmem [resolvable:$true] %s680
      %686 = dma.vmem_to_hbm [thread:$0]  %s681, 512, %s7, [#allocation4], 64, 64, 4
    $region37: #{tpu_custom_call.1} parent=1 // pred_fallthru
      _
    // Predicated region
    $region38: #{tpu_custom_call.1} parent=1 // pred_check
      _
    $region39: #{tpu_custom_call.1} parent=1 // pred_check_branch
      %688 = sbr.rel (0) target = $region41
    $region40: #{tpu_custom_call.1} parent=1 // pred_region
      %689 = dma.done [#allocation4], 1024
    $region41: #{tpu_custom_call.1} parent=1 // pred_fallthru
      _
    %690 = vsyncpa [#allocation3], 1
    %691 = vsyncpa [#allocation4], 1

</llo_original>
